<compile_context>
chip_gen: v7x
topology: tpu7x:2x2x1
jax: 0.10.0
libtpu: 0.0.40
codegen_flags: <defaults>
</compile_context>

<pallas_src>
import functools

import jax
import jax.numpy as jnp
from jax import lax
from jax.experimental import pallas as pl
from jax.experimental.pallas import tpu as pltpu

_EPS = 1e-7


def _cosine_fix_noise_kernel(x_hat_ref, noise_ref, out_ref, *,
                             total_t, total_b, tb, bb, tc):
    """One grid step processes a (Tb, Bb, D) block of noise outputs.

    x_hat_ref : (Bb, D)      f32 VMEM tile, pre-normalized original output
    noise_ref : (Tb, Bb, D)  VMEM tile (input dtype), Tb noise rows
    out_ref   : (1,1,8,128)  f32 per-block partial sum (broadcast-filled)
    """
    bi = pl.program_id(0)   # batch-block index (outer grid dim)
    ti = pl.program_id(1)   # t-block index (inner grid dim)

    x_hat = x_hat_ref[...]                                   # (Bb, D) f32
    n_chunks = tb // tc                                      # static

    def chunk(c, acc):
        # Upcast only this sub-chunk (caps f32 temporaries / vreg pressure).
        t0 = pl.multiple_of(c * tc, tc)
        y = noise_ref[pl.ds(t0, tc), :, :].astype(jnp.float32)    # (Tc, Bb, D)

        # Folded normalization: sum(x_hat * y) / (||y|| + eps).
        s = jnp.sum(x_hat[None, :, :] * y, axis=2)                # (Tc, Bb)
        ss = jnp.sum(y * y, axis=2)                               # (Tc, Bb)
        inv_y = pl.reciprocal(jnp.sqrt(ss) + _EPS, approx=False)  # (Tc, Bb)
        sim = s * inv_y
        # torch nan_to_num on y_hat -> NaN (and Inf) rows become sim == 0.
        sim = jnp.where(jnp.abs(sim) < jnp.float32(jnp.inf), sim, 0.0)
        dist = 1.0 - sim                                          # (Tc, Bb)

        # Mask padded t rows / batch rows of partial edge blocks.
        t_ids = ti * tb + t0 + lax.broadcasted_iota(jnp.int32, (tc, bb), 0)
        b_ids = bi * bb + lax.broadcasted_iota(jnp.int32, (tc, bb), 1)
        dist = jnp.where((t_ids < total_t) & (b_ids < total_b), dist, 0.0)
        return acc + jnp.sum(dist)

    partial = lax.fori_loop(0, n_chunks, chunk, jnp.float32(0.0), unroll=True)
    # Lane-dense, unmasked store of the per-block partial sum.
    out_ref[...] = jnp.broadcast_to(partial, out_ref.shape).astype(out_ref.dtype)


def _vmem_plan():
    """Generation-aware (vmem_limit_bytes, noise-block DMA budget)."""
    phys = None
    try:
        phys = getattr(pltpu.get_tpu_info(), "vmem_capacity_bytes", None)
    except Exception:  # e.g. interpret mode / unknown chip
        phys = None
    if phys is None:
        phys = 64 * 1024 * 1024  # conservative (v7x-sized)
    if phys >= 96 * 1024 * 1024:
        # v5e / v6e: 128 MiB physical VMEM.
        return 64 * 1024 * 1024, 32 * 1024 * 1024
    # v7x: 64 MiB physical VMEM per TensorCore.
    return 48 * 1024 * 1024, 20 * 1024 * 1024


def _choose_blocks(T, B, D, itemsize, dma_budget):
    """Pick (Tb, Bb, Tc): t-block, batch-block, in-kernel compute chunk."""
    # --- batch blocking: only if one double-buffered 4-row slab + resident
    #     f32 x_hat would blow the budget (large B*D / bf16 inputs). ---
    Bb = B
    if B > 8:
        per_row = 8 * D * itemsize + 8 * D   # 2*4 noise t-rows + 2*f32 x_hat
        bb_max = max(1, dma_budget // per_row)
        if bb_max < B:
            Bb = min(B, max(8, (bb_max // 8) * 8))

    # --- inner compute chunk: cap the f32 upcast/temporaries around ~2 MiB ---
    Tc = max(1, (2 * 1024 * 1024) // (Bb * D * 4))
    Tc = int(min(Tc, T))

    # --- Tb: as many t rows as fit the double-buffered DMA budget ---
    avail = dma_budget - 2 * Bb * D * 4          # subtract resident f32 x_hat
    per_t = Bb * D * itemsize
    n_chunks = max(1, avail // (2 * per_t * Tc))
    Tb = int(min(Tc * n_chunks, T))
    Tb = max(Tc, (Tb // Tc) * Tc)                # multiple of Tc

    # Keep >= 2 grid blocks so the grid can shard across v7x's two cores.
    if pl.cdiv(T, Tb) * pl.cdiv(B, Bb) < 2 and T >= 2:
        half = pl.cdiv(T, 2)
        Tb = max(Tc, ((half + Tc - 1) // Tc) * Tc)
        if Tb >= T:                              # shrink the chunk too
            Tc = int(half)
            Tb = Tc
    return int(Tb), int(Bb), int(Tc)


def cosine_fix_noise_loss(original_output, noise_output, random_times, w=1.0):
    """JAX/Pallas equivalent of CosineFixNoiseLoss.forward (jit-compatible).

    original_output : [B, D]
    noise_output    : [T, B, D]  (the stacked list of noise outputs)
    random_times    : int divisor used by the torch module
    """
    B, D = original_output.shape
    T = noise_output.shape[0]

    # Hoist the fixed-input normalization out of the T loop: computed once.
    x = original_output.astype(jnp.float32)
    x_norm = jnp.sqrt(jnp.sum(x * x, axis=1, keepdims=True))
    x_hat = jnp.nan_to_num(x / (x_norm + _EPS))

    vmem_limit, dma_budget = _vmem_plan()
    Tb, Bb, Tc = _choose_blocks(T, B, D, noise_output.dtype.itemsize, dma_budget)
    num_b_blocks = pl.cdiv(B, Bb)
    num_t_blocks = pl.cdiv(T, Tb)

    partials = pl.pallas_call(
        functools.partial(_cosine_fix_noise_kernel,
                          total_t=T, total_b=B, tb=Tb, bb=Bb, tc=Tc),
        out_shape=jax.ShapeDtypeStruct((num_b_blocks, num_t_blocks, 8, 128),
                                       jnp.float32),
        grid=(num_b_blocks, num_t_blocks),
        in_specs=[
            # Pre-normalized original output: constant across the inner t
            # loop (batch blocks are the OUTER grid dim, so Pallas skips the
            # re-DMA on repeated block indices).
            # TODO(synk): pipeline_mode=pl.Buffered(1) would drop its second
            # buffer for very large B*D; omitted to keep lowering conservative.
            pl.BlockSpec((Bb, D), lambda bi, ti: (bi, 0)),
            # Block of Tb noise rows x Bb batch rows (stays in input dtype).
            pl.BlockSpec((Tb, Bb, D), lambda bi, ti: (ti, bi, 0)),
        ],
        # Each grid step owns its output block -> no cross-step accumulator,
        # so both axes are parallel (v7x megacore sharding; neutral on
        # single-TC v5e/v6e).
        out_specs=pl.BlockSpec((1, 1, 8, 128), lambda bi, ti: (bi, ti, 0, 0)),
        compiler_params=pltpu.CompilerParams(
            dimension_semantics=("parallel", "parallel"),
            vmem_limit_bytes=vmem_limit,
        ),
    )(x_hat, noise_output)

    total = jnp.sum(partials[:, :, 0, 0])
    l_total = total / (jnp.float32(B) * jnp.float32(random_times))
    # TODO(synk): torch logs l_total.item(); we return the device scalar so the
    # function stays traceable — do the host transfer outside any jit region.
    log = {"CosFixNLoss": l_total}
    return l_total * jnp.float32(w), log


def _reference(original_output, noise_output, random_times, w=1.0):
    """Pure-JAX reference mirroring the torch module, for verification."""
    x = original_output.astype(jnp.float32)
    x_hat = jnp.nan_to_num(x / (jnp.linalg.norm(x, axis=1, keepdims=True) + _EPS))
    l_total = 0.0
    for t in range(noise_output.shape[0]):
        y = noise_output[t].astype(jnp.float32)
        y_hat = jnp.nan_to_num(y / (jnp.linalg.norm(y, axis=1, keepdims=True) + _EPS))
        dist = 1.0 - jnp.sum(x_hat * y_hat, axis=1)
        l_total = l_total + jnp.mean(dist)
    return (l_total / random_times) * w


if __name__ == "__main__":
    key = jax.random.PRNGKey(0)
    k1, k2, k3 = jax.random.split(key, 3)

    # Small but lane/sublane-aligned shapes: batch=8 (sublane multiple),
    # feature=128 (one full lane), random_times=4.
    B, D, T = 8, 128, 4
    original_output = jax.random.normal(k1, (B, D), dtype=jnp.float32)
    noise_output = jax.random.normal(k2, (T, B, D), dtype=jnp.float32)

    loss_fn = jax.jit(cosine_fix_noise_loss,
                      static_argnames=("random_times", "w"))
    loss, log = loss_fn(original_output, noise_output, random_times=T, w=1.0)
    loss = jax.block_until_ready(loss)

    ref = _reference(original_output, noise_output, random_times=T, w=1.0)
    assert jnp.allclose(loss, ref, atol=1e-5, rtol=1e-5), (loss, ref)
    assert abs(float(jax.device_get(log["CosFixNLoss"])) - float(ref)) < 1e-5

    # bf16 noise stream with T=5 (not a multiple of the t-block): exercises
    # the in-kernel padded-row mask and the per-chunk upcast path.
    T2 = 5
    noise_bf16 = jax.random.normal(k3, (T2, B, D), dtype=jnp.bfloat16)
    loss2, _ = loss_fn(original_output, noise_bf16, random_times=T2, w=0.5)
    loss2 = jax.block_until_ready(loss2)
    ref2 = _reference(original_output, noise_bf16, random_times=T2, w=0.5)
    assert jnp.allclose(loss2, ref2, atol=1e-3, rtol=1e-3), (loss2, ref2)

    print("KERNEL_OK")
</pallas_src>

<mosaic_0001>
module attributes {stable_mosaic.version = 11 : i64} {
  func.func @_cosine_fix_noise_kernel(%arg0: i32, %arg1: i32, %arg2: memref<8x128xf32, #tpu.memory_space<vmem>>, %arg3: memref<2x8x128xf32, #tpu.memory_space<vmem>>, %arg4: memref<1x1x8x128xf32, #tpu.memory_space<vmem>>) attributes {dimension_semantics = [#tpu.dimension_semantics<parallel>, #tpu.dimension_semantics<parallel>], iteration_bounds = array<i64: 1, 2>, scalar_prefetch = 0 : i64, scratch_operands = 0 : i64, tpu.core_type = #tpu.core_type<tc>, window_params = [{transform_indices = @transform_0, window_bounds = array<i64: 8, 128>}, {transform_indices = @transform_1, window_bounds = array<i64: 2, 8, 128>}, {transform_indices = @transform_2, window_bounds = array<i64: 1, 1, 8, 128>}]} {
    %c0 = arith.constant 0 : index
    %c0_0 = arith.constant 0 : index
    %0 = vector.load %arg2[%c0, %c0_0] : memref<8x128xf32, #tpu.memory_space<vmem>>, vector<8x128xf32>
    %cst = arith.constant 0.000000e+00 : f32
    %c0_i32 = arith.constant 0 : i32
    %c2_i32 = arith.constant 2 : i32
    %1 = arith.muli %c0_i32, %c2_i32 : i32
    %2 = tpu.assume_multiple %1, 2 : i32
    %3 = arith.index_cast %2 : i32 to index
    %c0_1 = arith.constant 0 : index
    %c0_2 = arith.constant 0 : index
    %4 = vector.load %arg3[%3, %c0_1, %c0_2] : memref<2x8x128xf32, #tpu.memory_space<vmem>>, vector<2x8x128xf32>
    %5 = vector.shape_cast %0 : vector<8x128xf32> to vector<1x8x128xf32>
    %6 = vector.broadcast %5 : vector<1x8x128xf32> to vector<2x8x128xf32>
    %7 = arith.mulf %6, %4 : vector<2x8x128xf32>
    %cst_3 = arith.constant dense<0.000000e+00> : vector<2x8xf32>
    %8 = vector.multi_reduction <add>, %7, %cst_3 [2] : vector<2x8x128xf32> to vector<2x8xf32>
    %9 = arith.mulf %4, %4 : vector<2x8x128xf32>
    %cst_4 = arith.constant dense<0.000000e+00> : vector<2x8xf32>
    %10 = vector.multi_reduction <add>, %9, %cst_4 [2] : vector<2x8x128xf32> to vector<2x8xf32>
    %11 = math.sqrt %10 : vector<2x8xf32>
    %cst_5 = arith.constant 1.000000e-07 : f32
    %12 = vector.broadcast %cst_5 : f32 to vector<2x8xf32>
    %13 = arith.addf %11, %12 : vector<2x8xf32>
    %14 = tpu.reciprocal %13 : vector<2x8xf32> -> vector<2x8xf32>
    %15 = arith.mulf %8, %14 : vector<2x8xf32>
    %16 = math.absf %15 : vector<2x8xf32>
    %cst_6 = arith.constant 0x7F800000 : f32
    %17 = vector.broadcast %cst_6 : f32 to vector<2x8xf32>
    %18 = arith.cmpf olt, %16, %17 : vector<2x8xf32>
    %cst_7 = arith.constant 0.000000e+00 : f32
    %19 = vector.broadcast %cst_7 : f32 to vector<2x8xf32>
    %20 = arith.select %18, %15, %19 : vector<2x8xi1>, vector<2x8xf32>
    %cst_8 = arith.constant 1.000000e+00 : f32
    %21 = vector.broadcast %cst_8 : f32 to vector<2x8xf32>
    %22 = arith.subf %21, %20 : vector<2x8xf32>
    %c2_i32_9 = arith.constant 2 : i32
    %23 = arith.muli %arg1, %c2_i32_9 : i32
    %24 = arith.addi %23, %2 : i32
    %25 = tpu.iota {dimensions = array<i32: 0>} : vector<2x8xi32>
    %26 = vector.broadcast %24 : i32 to vector<2x8xi32>
    %27 = arith.addi %26, %25 : vector<2x8xi32>
    %c8_i32 = arith.constant 8 : i32
    %28 = arith.muli %arg0, %c8_i32 : i32
    %29 = tpu.iota {dimensions = array<i32: 1>} : vector<2x8xi32>
    %30 = vector.broadcast %28 : i32 to vector<2x8xi32>
    %31 = arith.addi %30, %29 : vector<2x8xi32>
    %c4_i32 = arith.constant 4 : i32
    %32 = vector.broadcast %c4_i32 : i32 to vector<2x8xi32>
    %33 = arith.cmpi slt, %27, %32 : vector<2x8xi32>
    %c8_i32_10 = arith.constant 8 : i32
    %34 = vector.broadcast %c8_i32_10 : i32 to vector<2x8xi32>
    %35 = arith.cmpi slt, %31, %34 : vector<2x8xi32>
    %36 = arith.andi %33, %35 : vector<2x8xi1>
    %cst_11 = arith.constant 0.000000e+00 : f32
    %37 = vector.broadcast %cst_11 : f32 to vector<2x8xf32>
    %38 = arith.select %36, %22, %37 : vector<2x8xi1>, vector<2x8xf32>
    %39 = vector.shape_cast %38 : vector<2x8xf32> to vector<1x2x8xf32>
    %cst_12 = arith.constant dense<0.000000e+00> : vector<1xf32>
    %40 = vector.multi_reduction <add>, %39, %cst_12 [1, 2] : vector<1x2x8xf32> to vector<1xf32>
    %41 = vector.shape_cast %40 : vector<1xf32> to vector<1x1x1xf32>
    %42 = vector.extract %41[0, 0, 0] : f32 from vector<1x1x1xf32>
    %43 = arith.addf %cst, %42 : f32
    %c1_i32 = arith.constant 1 : i32
    %44 = vector.broadcast %43 : f32 to vector<1x1x8x128xf32>
    %c0_13 = arith.constant 0 : index
    %c0_14 = arith.constant 0 : index
    %c0_15 = arith.constant 0 : index
    %c0_16 = arith.constant 0 : index
    %45 = vector.load %arg4[%c0_13, %c0_14, %c0_15, %c0_16] : memref<1x1x8x128xf32, #tpu.memory_space<vmem>>, vector<1x1x8x128xf32>
    tpu.vector_store %arg4[%c0_13, %c0_14, %c0_15, %c0_16], %44 {strides = array<i32>} : memref<1x1x8x128xf32, #tpu.memory_space<vmem>>, vector<1x1x8x128xf32>,
    return
  }
  func.func @transform_0(%arg0: i32, %arg1: i32) -> (i32, i32) {
    %c0_i32 = arith.constant 0 : i32
    %c0_i32_0 = arith.constant 0 : i32
    return %arg0, %c0_i32 : i32, i32
  }
  func.func @transform_1(%arg0: i32, %arg1: i32) -> (i32, i32, i32) {
    %c0_i32 = arith.constant 0 : i32
    %c0_i32_0 = arith.constant 0 : i32
    return %arg1, %arg0, %c0_i32 : i32, i32, i32
  }
  func.func @transform_2(%arg0: i32, %arg1: i32) -> (i32, i32, i32, i32) {
    %c0_i32 = arith.constant 0 : i32
    %c0_i32_0 = arith.constant 0 : i32
    %c0_i32_1 = arith.constant 0 : i32
    return %arg0, %arg1, %c0_i32, %c0_i32_0 : i32, i32, i32, i32
  }
}

</mosaic_0001>

<llo_original>
// kernel: cosine_fix_noise_loss.1
$region0: #{cosine_fix_noise_loss.1}
  #allocation0 [shape = 'u32[]', space=smem, size = 0x4, offset = 0x4, fixed_abs, tag = 'smem constant byte address 0x4 - core index']
  #allocation1 [shape = 'u32[144,128]{1,0:T(1,128)}', space=vmem, size = 0x12000, scoped, tag = 'internal scratch']
  %s0 = inlined_call_operand.vmem [shape: f32[8,128], index: 0, kind: input, shape index: {}]
  %s1 = inlined_call_operand.hbm [shape: f32[4,8,128], index: 1, kind: input, shape index: {}]
  %s2 = inlined_call_operand.vmem [shape: f32[1,2,8,128], index: 2, kind: output, shape index: {}]
  %s3 = sld [smem:[#allocation0]]
  $region45: #{cosine_fix_noise_loss.1} parent=0
    _
  %s5 = ssub.s32 1, %s3
  %s6 = scalar_select 0, %s5, %s3
  $region1: #{cosine_fix_noise_loss.1} parent=0
    #allocation2 [shape = 'u8[16384]{0}', space=vmem, size = 0x4000, scoped, tag = 'input window, operand 1']
    #allocation3 [shape = 's32[2]{0}', space=sflag, size = 0x8, scoped, tag = 'scoped memory for cosine_fix_noise_loss.1']
    %7 = vsyncpa [#allocation3], 0
    %s8 = scalar_lea.sflag [#allocation3], 1
    %9 = vsyncpa %s8, 0
    loop: start=0, step=1, limit=4
    $region2: #{cosine_fix_noise_loss.1} parent=1 // loop_pre_header
      _
    $region3: #{cosine_fix_noise_loss.1} parent=1 // loop_header
      %s11 = sphi 0, %s15
      %p12 = scmp.ge.s32.totalorder %s11, 4
      %s18 = sphi 0, %s30
      %s19 = sphi 0, %s26
      %s20 = sphi 0, %s18
      %s21 = sphi 0, %s19
      %s22 = sphi 0, %s20
      %s23 = sphi 0, %s21
      %s33 = sphi 0, %s35
      %s36 = sphi 0, %s33
      %s37 = sphi 0, %s36
      %s53 = sphi 0, %s37
      %s61 = sphi 0, %s63
      %s64 = sphi 0, %s61
      %s65 = sphi 0, %s64
      %s81 = sphi 0, %s65
      %s89 = sphi 0, %s91
      %s92 = sphi 0, %s89
      %s93 = sphi 0, %s92
      %s109 = sphi 0, %s93
    $region4: #{cosine_fix_noise_loss.1} parent=1 // loop_header_branch
      %14 = sbr.rel (%p12) target = $region8
    $region5: #{cosine_fix_noise_loss.1} parent=1 // loop_body
      %s16 = ssub.s32 %s11, 1
      %s17 = ssub.s32 %s11, 2
      %s24 = sadd.s32 1, %s19
      %p25 = scmp.ge.s32.totalorder %s24, 2
      %s26 = scalar_select %p25, 0, %s24
      %s27 = sadd.s32 1, %s18
      %s28 = scalar_select %p25, %s27, %s18
      %p29 = scmp.ge.s32.totalorder %s28, 1
      %s30 = scalar_select %p29, 0, %s28
      %s31 = ssub.s32 %s18, %s30
      %p32 = scmp.eq.s32.totalorder %s31, 0
      %s34 = sadd.s32 %s33, 1
      %s35 = scalar_select %p32, %s33, %s34
      %p38 = pneg %p32
      %p39 = scmp.eq.s32.totalorder %s11, 1
      %p40 = por %p38, %p39
      %p41 = scmp.ne.s32.totalorder %s33, %s36
      %p42 = scmp.eq.s32.totalorder %s11, 0
      %p43 = por %p41, %p42
      %p44 = scmp.ne.s32.totalorder %s33, %s36
      %p45 = scmp.eq.s32.totalorder %s16, 1
      %p46 = por %p44, %p45
      %p47 = scmp.ne.s32.totalorder %s36, %s37
      %p48 = scmp.eq.s32.totalorder %s16, 0
      %p49 = por %p47, %p48
      %p50 = scmp.ne.s32.totalorder %s36, %s37
      %p51 = scmp.eq.s32.totalorder %s17, 1
      %p52 = por %p50, %p51
      %p54 = scmp.ne.s32.totalorder %s37, %s53
      %p55 = scmp.eq.s32.totalorder %s17, 0
      %p56 = por %p54, %p55
      %s57 = ssub.s32 %s19, %s26
      %s58 = ssub.s32 %s18, %s30
      %s59 = sor.u32 %s57, %s58
      %p60 = scmp.eq.s32.totalorder %s59, 0
      %s62 = sadd.s32 %s61, 1
      %s63 = scalar_select %p60, %s61, %s62
      %p66 = pneg %p60
      %p67 = scmp.eq.s32.totalorder %s11, 1
      %p68 = por %p66, %p67
      %p69 = scmp.ne.s32.totalorder %s61, %s64
      %p70 = scmp.eq.s32.totalorder %s11, 0
      %p71 = por %p69, %p70
      %p72 = scmp.ne.s32.totalorder %s61, %s64
      %p73 = scmp.eq.s32.totalorder %s16, 1
      %p74 = por %p72, %p73
      %p75 = scmp.ne.s32.totalorder %s64, %s65
      %p76 = scmp.eq.s32.totalorder %s16, 0
      %p77 = por %p75, %p76
      %p78 = scmp.ne.s32.totalorder %s64, %s65
      %p79 = scmp.eq.s32.totalorder %s17, 1
      %p80 = por %p78, %p79
      %p82 = scmp.ne.s32.totalorder %s65, %s81
      %p83 = scmp.eq.s32.totalorder %s17, 0
      %p84 = por %p82, %p83
      %s85 = ssub.s32 %s18, %s30
      %s86 = ssub.s32 %s19, %s26
      %s87 = sor.u32 %s85, %s86
      %p88 = scmp.eq.s32.totalorder %s87, 0
      %s90 = sadd.s32 %s89, 1
      %s91 = scalar_select %p88, %s89, %s90
      %p94 = pneg %p88
      %p95 = scmp.eq.s32.totalorder %s11, 1
      %p96 = por %p94, %p95
      %p97 = scmp.ne.s32.totalorder %s89, %s92
      %p98 = scmp.eq.s32.totalorder %s11, 0
      %p99 = por %p97, %p98
      %p100 = scmp.ne.s32.totalorder %s89, %s92
      %p101 = scmp.eq.s32.totalorder %s16, 1
      %p102 = por %p100, %p101
      %p103 = scmp.ne.s32.totalorder %s92, %s93
      %p104 = scmp.eq.s32.totalorder %s16, 0
      %p105 = por %p103, %p104
      %p106 = scmp.ne.s32.totalorder %s92, %s93
      %p107 = scmp.eq.s32.totalorder %s17, 1
      %p108 = por %p106, %p107
      %p110 = scmp.ne.s32.totalorder %s93, %s109
      %p111 = scmp.eq.s32.totalorder %s17, 0
      %p112 = por %p110, %p111
      %p113 = scmp.le.s32.totalorder 1, %s11
      %p114 = scmp.lt.s32.totalorder %s11, 3
      %p115 = pnand %p113, %p114
      %p116 = pneg %p115
      // Predicated region
      $region9: #{cosine_fix_noise_loss.1} parent=5 // pred_check
        _
      $region10: #{cosine_fix_noise_loss.1} parent=5 // pred_check_branch
        %118 = sbr.rel (%p115) target = $region12
      $region11: #{cosine_fix_noise_loss.1} parent=5 // pred_region
        %s119 = ssub.s32 %s11, 1
        // Predicated region
        $region13: #{cosine_fix_noise_loss.1} parent=11 // pred_check
          %p120 = pneg %p49
        $region14: #{cosine_fix_noise_loss.1} parent=11 // pred_check_branch
          %122 = sbr.rel (%p120) target = $region16
        $region15: #{cosine_fix_noise_loss.1} parent=11 // pred_region
          %p123 = scmp.lt.s32.totalorder %s20, 0
          %s124 = scalar_select %p123, %s20, 0
          %s125 = smul.addr %s124, 8
          %s126 = scalar_lea.vmem %s0, %s125
        $region16: #{cosine_fix_noise_loss.1} parent=11 // pred_fallthru
          _
      $region12: #{cosine_fix_noise_loss.1} parent=5 // pred_fallthru
        _
      %p127 = scmp.lt.s32.totalorder %s11, 2
      // Predicated region
      $region17: #{cosine_fix_noise_loss.1} parent=5 // pred_check
        %p128 = pneg %p127
      $region18: #{cosine_fix_noise_loss.1} parent=5 // pred_check_branch
        %130 = sbr.rel (%p128) target = $region20
      $region19: #{cosine_fix_noise_loss.1} parent=5 // pred_region
        // Predicated region
        $region21: #{cosine_fix_noise_loss.1} parent=19 // pred_check
          %p131 = pneg %p71
        $region22: #{cosine_fix_noise_loss.1} parent=19 // pred_check_branch
          %133 = sbr.rel (%p131) target = $region24
        $region23: #{cosine_fix_noise_loss.1} parent=19 // pred_region
          %s134 = sand.u32 %s61, 1
          %s135 = scalar_lea.sflag [#allocation3], %s134
          %s136 = sand.u32 %s61, 1
          %s137 = smul.addr %s136, 16
          %s138 = scalar_lea.vmem [#allocation2], %s137
          %s139 = smul.u32 2, %s19
          %s141 = ssub.s32 256, 256
          %142 = vsyncadd %s135, %s141
          %s143 = sadd.s32 %s18, %s139
          %s144 = smul.addr %s143, 128
          %s145 = scalar_lea.hbm %s1, %s144
          %s146 = sshll.u32 %s138, 4
          %s147 = int_to_ptr.vmem [resolvable:$true] %s146
          %152 = dma.hbm_to_vmem [thread:$0]  %s145, 256, %s147, %s135, 128, 128, 8
        $region24: #{cosine_fix_noise_loss.1} parent=19 // pred_fallthru
          _
      $region20: #{cosine_fix_noise_loss.1} parent=5 // pred_fallthru
        _
      %p153 = scmp.le.s32.totalorder 1, %s11
      %p154 = scmp.lt.s32.totalorder %s11, 3
      %p155 = pnand %p153, %p154
      %p156 = pneg %p155
      // Predicated region
      $region25: #{cosine_fix_noise_loss.1} parent=5 // pred_check
        _
      $region26: #{cosine_fix_noise_loss.1} parent=5 // pred_check_branch
        %158 = sbr.rel (%p155) target = $region28
      $region27: #{cosine_fix_noise_loss.1} parent=5 // pred_region
        %s159 = ssub.s32 %s11, 1
        %s160 = sand.u32 %s64, 1
        %s161 = scalar_lea.sflag [#allocation3], %s160
        %s162 = sand.u32 %s64, 1
        %s163 = smul.addr %s162, 16
        %s164 = scalar_lea.vmem [#allocation2], %s163
        // Predicated region
        $region29: #{cosine_fix_noise_loss.1} parent=27 // pred_check
          %p165 = pneg %p77
        $region30: #{cosine_fix_noise_loss.1} parent=27 // pred_check_branch
          %167 = sbr.rel (%p165) target = $region32
        $region31: #{cosine_fix_noise_loss.1} parent=27 // pred_region
          %168 = dma.done %s161, 256
        $region32: #{cosine_fix_noise_loss.1} parent=27 // pred_fallthru
          _
        %p169 = scmp.lt.s32.totalorder %s20, 0
        %s170 = scalar_select %p169, %s20, 0
        %s171 = smul.addr %s170, 8
        %s172 = scalar_lea.vmem %s0, %s171
        %p173 = pneg %p49
        %p174 = pneg %p46
        %s175 = sand.u32 %s64, 1
        %s176 = scalar_lea.sflag [#allocation3], %s175
        %s177 = sand.u32 %s64, 1
        %s178 = smul.addr %s177, 16
        %s179 = scalar_lea.vmem [#allocation2], %s178
        %p180 = pneg %p77
        %p181 = pneg %p74
        %p182 = pneg %p105
        %p183 = pneg %p102
        %p184 = scmp.lt.s32.totalorder %s20, 0
        %s185 = scalar_select %p184, %s20, 0
        %p186 = scmp.lt.s32.totalorder %s21, 1
        %s187 = scalar_select %p186, %s21, 1
        %s188 = smul.addr %s185, 2
        %s189 = sadd.s32 %s187, %s188
        %s190 = smul.addr %s189, 8
        %s191 = scalar_lea.vmem %s2, %s190
        %p192 = scmp.lt.s32.totalorder %s20, 0
        %s193 = scalar_select %p192, %s20, 0
        %s194 = smul.addr %s193, 8
        %s195 = scalar_lea.vmem %s0, %s194
        %s196 = smul.u32 2, %s21
        %p197 = scmp.lt.s32.totalorder %s20, 0
        %s198 = scalar_select %p197, %s20, 0
        %p199 = scmp.lt.s32.totalorder %s21, 1
        %s200 = scalar_select %p199, %s21, 1
        %s201 = smul.addr %s198, 2
        %s202 = sadd.s32 %s200, %s201
        %s203 = smul.addr %s202, 8
        %s204 = scalar_lea.vmem %s2, %s203
        %v205 = vld [vmem:[%s195] sm:$0xff]
        %s206 = smul.u32 0, 8
        %s207 = scalar_lea.vmem %s164, %s206 [#allocation2]
        %v208 = vld [vmem:[%s207] sm:$0xff]
        %v209 = vld [vmem:[%s207 + $0x8] sm:$0xff]
        %v210 = vmul.f32 %v205, %v208
        %v211 = vmul.f32 %v205, %v209
        %212 = vadd.xlane.f32.xlu0 %v210
        %v213 = vpop.xlane.xlu0 %212
        %214 = vadd.xlane.f32.xlu0 %v211
        %v215 = vpop.xlane.xlu0 %214
        %v216 = vmul.f32 %v208, %v208
        %v217 = vmul.f32 %v209, %v209
        %218 = vadd.xlane.f32.xlu0 %v216
        %v219 = vpop.xlane.xlu0 %218
        %220 = vadd.xlane.f32.xlu0 %v217
        %v221 = vpop.xlane.xlu0 %220
        %v222 = vrsqrt.pop %v219
        %v223 = vmul.f32 %v219, %v222
        %vm224 = vcmp.eq.f32.partialorder %v219, inf
        %v225 = vsel %vm224, %v219, %v223
        %vm226 = vcmp.eq.f32.partialorder %v219, 0.0
        %v227 = vand.u32 %v219, 2147483648
        %v228 = vsel %vm226, %v227, %v225
        %v229 = vrsqrt.pop %v221
        %v230 = vmul.f32 %v221, %v229
        %vm231 = vcmp.eq.f32.partialorder %v221, inf
        %v232 = vsel %vm231, %v221, %v230
        %vm233 = vcmp.eq.f32.partialorder %v221, 0.0
        %v234 = vand.u32 %v221, 2147483648
        %v235 = vsel %vm233, %v234, %v232
        %v236 = vadd.f32 %v228, 1e-07
        %v237 = vadd.f32 %v235, 1e-07
        %v238 = vrcp.pop %v236
        %v239 = vrcp.pop %v237
        %v240 = vmul.f32 %v213, %v238
        %v241 = vmul.f32 %v215, %v239
        %v242 = vand.u32 2147483647, %v240
        %v243 = vand.u32 2147483647, %v241
        %vm244 = vcmp.lt.f32.partialorder %v242, inf
        %vm245 = vcmp.lt.f32.partialorder %v243, inf
        %v246 = vsel %vm244, %v240, 0.0
        %v247 = vsel %vm245, %v241, 0.0
        %v248 = vsub.f32 1.0, %v246
        %v249 = vsub.f32 1.0, %v247
        %s250 = smul.u32 %s21, 2
        %s251 = sadd.s32 %s250, 0
        %v252 = vlaneseq
        %v253 = vshrl.u32 %v252, 7
        %v254 = vstv %s251
        %v255 = vadd.s32 %v254, %v253
        %s256 = smul.u32 %s20, 8
        %v257 = vlaneseq
        %v258 = vand.u32 %v257, 127
        %v259 = vstv %s256
        %v260 = vadd.s32 %v259, %v258
        %vm261 = vcmp.lt.s32.totalorder %v255, 4
        %vm262 = vcmp.lt.s32.totalorder %v260, 8
        %vm263 = vmand %vm261, %vm262
        %v266 = vlaneseq
        %v267 = vshrl.u32 %v266, 7
        %v268 = vsub.s32 %v258, %v267
        %v269 = vrot.slane %v248, %v268
        %v270 = vlaneseq
        %v271 = vshrl.u32 %v270, 7
        %v272 = vsub.s32 %v258, %v271
        %v273 = vrot.slane %v249, %v272
        %vm274 = vcmask 1041409
        %v275 = vsel %vm274, %v273, %v269
        %v277 = vsel %vm263, %v275, 0.0
        %vm278 = vcmask 58368
        %v279 = vsel %vm278, %v277, 0.0
        %280 = vadd.xlane.f32.xlu0 %v279
        %v281 = vpop.xlane.xlu0 %280
        %v282 = vrot.slane %v281, 4
        %v283 = vadd.f32 %v281, %v282
        %v284 = vrot.slane %v283, 2
        %v285 = vadd.f32 %v283, %v284
        %v286 = vrot.slane %v285, 1
        %v287 = vadd.f32 %v285, %v286
        %s288 = vtos %v287
        %s289 = sadd.f32 %s288, 0.0
        %v290 = vstv %s289
        %291 = vst [vmem:[%s204] sm:$0xff] %v290
        %p292 = scmp.lt.s32.totalorder %s20, 0
        %s293 = scalar_select %p292, %s20, 0
        %p294 = scmp.lt.s32.totalorder %s21, 1
        %s295 = scalar_select %p294, %s21, 1
        %s296 = smul.addr %s293, 2
        %s297 = sadd.s32 %s295, %s296
        %s298 = smul.addr %s297, 8
        %s299 = scalar_lea.vmem %s2, %s298
        // Predicated region
        $region33: #{cosine_fix_noise_loss.1} parent=27 // pred_check
          %p300 = pneg %p102
        $region34: #{cosine_fix_noise_loss.1} parent=27 // pred_check_branch
          %302 = sbr.rel (%p300) target = $region36
        $region35: #{cosine_fix_noise_loss.1} parent=27 // pred_region
          _
        $region36: #{cosine_fix_noise_loss.1} parent=27 // pred_fallthru
          _
      $region28: #{cosine_fix_noise_loss.1} parent=5 // pred_fallthru
        _
      %p303 = scmp.le.s32.totalorder 2, %s11
      // Predicated region
      $region37: #{cosine_fix_noise_loss.1} parent=5 // pred_check
        %p304 = pneg %p303
      $region38: #{cosine_fix_noise_loss.1} parent=5 // pred_check_branch
        %306 = sbr.rel (%p304) target = $region40
      $region39: #{cosine_fix_noise_loss.1} parent=5 // pred_region
        %s307 = ssub.s32 %s11, 2
        // Predicated region
        $region41: #{cosine_fix_noise_loss.1} parent=39 // pred_check
          %p308 = pneg %p108
        $region42: #{cosine_fix_noise_loss.1} parent=39 // pred_check_branch
          %310 = sbr.rel (%p308) target = $region44
        $region43: #{cosine_fix_noise_loss.1} parent=39 // pred_region
          %p311 = scmp.lt.s32.totalorder %s22, 0
          %s312 = scalar_select %p311, %s22, 0
          %p313 = scmp.lt.s32.totalorder %s23, 1
          %s314 = scalar_select %p313, %s23, 1
          %s315 = smul.addr %s312, 2
          %s316 = sadd.s32 %s314, %s315
          %s317 = smul.addr %s316, 8
          %s318 = scalar_lea.vmem %s2, %s317
        $region44: #{cosine_fix_noise_loss.1} parent=39 // pred_fallthru
          _
      $region40: #{cosine_fix_noise_loss.1} parent=5 // pred_fallthru
        _
    $region6: #{cosine_fix_noise_loss.1} parent=1 // loop_footer
      %s15 = sadd.s32 1, %s11
    $region7: #{cosine_fix_noise_loss.1} parent=1 // loop_footer_branch
      %10 = sbr.rel target = $region3
    $region8: #{cosine_fix_noise_loss.1} parent=1 // loop_exit
      _
    %319 = vsyncpa [#allocation3], 1
    %s320 = scalar_lea.sflag [#allocation3], 1
    %321 = vsyncpa %s320, 1

</llo_original>
